<compile_context>
chip_gen: v5e
topology: v5e:2x2
jax: 0.10.0
libtpu: 0.0.40
codegen_flags: <defaults>
</compile_context>

<pallas_src>
import functools

import jax
import jax.numpy as jnp
from jax.experimental import pallas as pl
from jax.experimental.pallas import tpu as pltpu


def _vocab_embed_gather_kernel(ids_ref, w_hbm, out_ref, sem, *, tn, vocab, d):
    """One grid step gathers `tn` embedding rows from HBM into the output tile.

    ids_ref : SMEM (N_pad,) int32   -- scalar-prefetched flat token ids
    w_hbm   : HBM  (V, D)           -- concatenated vocab-parallel shards
    out_ref : VMEM (tn, D)          -- output tile for this grid step
    sem     : DMA semaphores, shape (tn,)
    """
    i = pl.program_id(0)
    base = i * tn

    # Issue all row-gather DMAs (HBM weight row -> output VMEM row), then wait.
    copies = []
    for t in range(tn):
        tok = ids_ref[base + t]
        tok_c = jnp.clip(tok, 0, vocab - 1)          # memory safety for OOB ids
        cp = pltpu.make_async_copy(
            w_hbm.at[pl.ds(tok_c, 1), :],             # (1, D) source row in HBM
            out_ref.at[pl.ds(t, 1), :],               # (1, D) destination row
            sem.at[t],
        )
        cp.start()
        copies.append(cp)
    for cp in copies:
        cp.wait()

    # Reference semantics: a token outside [0, V) is masked on every partition,
    # so its all-reduced output row is exactly zero.
    for t in range(tn):
        tok = ids_ref[base + t]

        @pl.when((tok < 0) | (tok >= vocab))
        def _():
            out_ref[pl.ds(t, 1), :] = jnp.zeros((1, d), out_ref.dtype)


def vocab_parallel_embedding(ids, weight_shards, *, tokens_per_step=8):
    """ids: (B, S) int32; weight_shards: (P, V_per, D) -> (B, S, D)."""
    P, V_per, D = weight_shards.shape
    V = P * V_per
    B, S = ids.shape
    N = B * S

    tn = tokens_per_step                              # multiple of 8 (sublane)
    n_steps = pl.cdiv(N, tn)
    n_pad = n_steps * tn

    ids_flat = jnp.zeros((n_pad,), jnp.int32).at[:N].set(
        ids.reshape(N).astype(jnp.int32))

    # Concatenating the vocab-parallel shards along the vocab axis recovers the
    # full table; a direct row gather == masked local lookup + all-reduce.
    weight_full = weight_shards.reshape(V, D)

    kernel = functools.partial(_vocab_embed_gather_kernel,
                               tn=tn, vocab=V, d=D)

    out = pl.pallas_call(
        kernel,
        out_shape=jax.ShapeDtypeStruct((n_pad, D), weight_full.dtype),
        grid_spec=pltpu.PrefetchScalarGridSpec(
            num_scalar_prefetch=1,                    # ids -> SMEM
            grid=(n_steps,),
            in_specs=[
                pl.BlockSpec(memory_space=pl.ANY),    # weight stays in HBM
            ],
            out_specs=pl.BlockSpec((tn, D), lambda i, ids: (i, 0)),
            scratch_shapes=[pltpu.SemaphoreType.DMA((tn,))],
        ),
        compiler_params=pltpu.CompilerParams(
            # Disjoint output tiles -> safe to shard token tiles across the
            # two TensorCores on v7x; harmless on single-TC v5e/v6e.
            dimension_semantics=("parallel",),
        ),
    )(ids_flat, weight_full)

    return out[:N].reshape(B, S, D)


if __name__ == "__main__":
    # Small, module-consistent shapes.
    B, S = 2, 8                  # input_: (B, S) token ids
    num_embeddings = 64          # total vocab
    embed_dim = 128              # D (lane-dense output)
    tp_size = 2                  # simulated PARALLEL_1D world size
    padding_idx = 0
    V_per = num_embeddings // tp_size

    key = jax.random.PRNGKey(0)
    k_w, k_ids = jax.random.split(key)

    # Deterministic normal init of the (partitioned) weight, as in __init__.
    full_weight = jax.random.normal(
        k_w, (num_embeddings, embed_dim), dtype=jnp.float32) * 0.02
    # _fill_padding_idx_with_zero (padding_idx lives in partition 0 here).
    full_weight = full_weight.at[padding_idx].set(0.0)
    weight_shards = full_weight.reshape(tp_size, V_per, embed_dim)

    ids = jax.random.randint(k_ids, (B, S), 0, num_embeddings, dtype=jnp.int32)

    out = vocab_parallel_embedding(ids, weight_shards)
    out = jax.block_until_ready(out)

    # Reference: full (post-all-reduce) embedding lookup.
    ref = jnp.take(full_weight, ids.reshape(-1), axis=0).reshape(B, S, embed_dim)
    assert out.shape == (B, S, embed_dim)
    assert jnp.allclose(out, ref, atol=1e-6), "mismatch vs reference embedding"

    print("KERNEL_OK")
</pallas_src>

<mosaic_0001>
module attributes {stable_mosaic.version = 11 : i64} {
  func.func @_vocab_embed_gather_kernel(%arg0: i32, %arg1: memref<16xi32, #tpu.memory_space<smem>>, %arg2: memref<64x128xf32, #tpu.memory_space<any>>, %arg3: memref<8x128xf32, #tpu.memory_space<vmem>>, %arg4: memref<8x!tpu.dma_semaphore, #tpu.memory_space<semaphore_mem>>) attributes {dimension_semantics = [#tpu.dimension_semantics<parallel>], iteration_bounds = array<i64: 2>, scalar_prefetch = 1 : i64, scratch_operands = 1 : i64, tpu.core_type = #tpu.core_type<tc>, window_params = [{}, {transform_indices = @transform_1, window_bounds = array<i64: 8, 128>}]} {
    %c8_i32 = arith.constant 8 : i32
    %0 = arith.muli %arg0, %c8_i32 : i32
    %c0_i32 = arith.constant 0 : i32
    %1 = arith.addi %0, %c0_i32 : i32
    %2 = arith.index_cast %1 : i32 to index
    %3 = memref.load %arg1[%2] : memref<16xi32, #tpu.memory_space<smem>>
    %c0_i32_0 = arith.constant 0 : i32
    %c63_i32 = arith.constant 63 : i32
    %4 = arith.maxsi %c0_i32_0, %3 : i32
    %5 = arith.minsi %c63_i32, %4 : i32
    %c0_i32_1 = arith.constant 0 : i32
    %c0_i32_2 = arith.constant 0 : i32
    %6 = tpu.memref_slice %arg2[%5, %c0_i32_2] : memref<64x128xf32, #tpu.memory_space<any>> -> memref<1x128xf32, #tpu.memory_space<any>>
    %c0_i32_3 = arith.constant 0 : i32
    %c0_i32_4 = arith.constant 0 : i32
    %7 = tpu.memref_slice %arg3[%c0_i32_3, %c0_i32_4] : memref<8x128xf32, #tpu.memory_space<vmem>> -> memref<1x128xf32, #tpu.memory_space<vmem>>
    %8 = tpu.memref_slice %arg4[%c0_i32_1] : memref<8x!tpu.dma_semaphore, #tpu.memory_space<semaphore_mem>> -> memref<1x!tpu.dma_semaphore, #tpu.memory_space<semaphore_mem>>
    %9 = tpu.memref_squeeze %8 : memref<1x!tpu.dma_semaphore, #tpu.memory_space<semaphore_mem>> -> memref<!tpu.dma_semaphore, #tpu.memory_space<semaphore_mem>>
    tpu.enqueue_dma source(%6 : memref<1x128xf32, #tpu.memory_space<any>>) target(%7 : memref<1x128xf32, #tpu.memory_space<vmem>>) target_semaphore(%9 : memref<!tpu.dma_semaphore, #tpu.memory_space<semaphore_mem>>)
    %c1_i32 = arith.constant 1 : i32
    %10 = arith.addi %0, %c1_i32 : i32
    %11 = arith.index_cast %10 : i32 to index
    %12 = memref.load %arg1[%11] : memref<16xi32, #tpu.memory_space<smem>>
    %c0_i32_5 = arith.constant 0 : i32
    %c63_i32_6 = arith.constant 63 : i32
    %13 = arith.maxsi %c0_i32_5, %12 : i32
    %14 = arith.minsi %c63_i32_6, %13 : i32
    %c1_i32_7 = arith.constant 1 : i32
    %c0_i32_8 = arith.constant 0 : i32
    %15 = tpu.memref_slice %arg2[%14, %c0_i32_8] : memref<64x128xf32, #tpu.memory_space<any>> -> memref<1x128xf32, #tpu.memory_space<any>>
    %c1_i32_9 = arith.constant 1 : i32
    %c0_i32_10 = arith.constant 0 : i32
    %16 = tpu.memref_slice %arg3[%c1_i32_9, %c0_i32_10] : memref<8x128xf32, #tpu.memory_space<vmem>> -> memref<1x128xf32, #tpu.memory_space<vmem>>
    %17 = tpu.memref_slice %arg4[%c1_i32_7] : memref<8x!tpu.dma_semaphore, #tpu.memory_space<semaphore_mem>> -> memref<1x!tpu.dma_semaphore, #tpu.memory_space<semaphore_mem>>
    %18 = tpu.memref_squeeze %17 : memref<1x!tpu.dma_semaphore, #tpu.memory_space<semaphore_mem>> -> memref<!tpu.dma_semaphore, #tpu.memory_space<semaphore_mem>>
    tpu.enqueue_dma source(%15 : memref<1x128xf32, #tpu.memory_space<any>>) target(%16 : memref<1x128xf32, #tpu.memory_space<vmem>>) target_semaphore(%18 : memref<!tpu.dma_semaphore, #tpu.memory_space<semaphore_mem>>)
    %c2_i32 = arith.constant 2 : i32
    %19 = arith.addi %0, %c2_i32 : i32
    %20 = arith.index_cast %19 : i32 to index
    %21 = memref.load %arg1[%20] : memref<16xi32, #tpu.memory_space<smem>>
    %c0_i32_11 = arith.constant 0 : i32
    %c63_i32_12 = arith.constant 63 : i32
    %22 = arith.maxsi %c0_i32_11, %21 : i32
    %23 = arith.minsi %c63_i32_12, %22 : i32
    %c2_i32_13 = arith.constant 2 : i32
    %c0_i32_14 = arith.constant 0 : i32
    %24 = tpu.memref_slice %arg2[%23, %c0_i32_14] : memref<64x128xf32, #tpu.memory_space<any>> -> memref<1x128xf32, #tpu.memory_space<any>>
    %c2_i32_15 = arith.constant 2 : i32
    %c0_i32_16 = arith.constant 0 : i32
    %25 = tpu.memref_slice %arg3[%c2_i32_15, %c0_i32_16] : memref<8x128xf32, #tpu.memory_space<vmem>> -> memref<1x128xf32, #tpu.memory_space<vmem>>
    %26 = tpu.memref_slice %arg4[%c2_i32_13] : memref<8x!tpu.dma_semaphore, #tpu.memory_space<semaphore_mem>> -> memref<1x!tpu.dma_semaphore, #tpu.memory_space<semaphore_mem>>
    %27 = tpu.memref_squeeze %26 : memref<1x!tpu.dma_semaphore, #tpu.memory_space<semaphore_mem>> -> memref<!tpu.dma_semaphore, #tpu.memory_space<semaphore_mem>>
    tpu.enqueue_dma source(%24 : memref<1x128xf32, #tpu.memory_space<any>>) target(%25 : memref<1x128xf32, #tpu.memory_space<vmem>>) target_semaphore(%27 : memref<!tpu.dma_semaphore, #tpu.memory_space<semaphore_mem>>)
    %c3_i32 = arith.constant 3 : i32
    %28 = arith.addi %0, %c3_i32 : i32
    %29 = arith.index_cast %28 : i32 to index
    %30 = memref.load %arg1[%29] : memref<16xi32, #tpu.memory_space<smem>>
    %c0_i32_17 = arith.constant 0 : i32
    %c63_i32_18 = arith.constant 63 : i32
    %31 = arith.maxsi %c0_i32_17, %30 : i32
    %32 = arith.minsi %c63_i32_18, %31 : i32
    %c3_i32_19 = arith.constant 3 : i32
    %c0_i32_20 = arith.constant 0 : i32
    %33 = tpu.memref_slice %arg2[%32, %c0_i32_20] : memref<64x128xf32, #tpu.memory_space<any>> -> memref<1x128xf32, #tpu.memory_space<any>>
    %c3_i32_21 = arith.constant 3 : i32
    %c0_i32_22 = arith.constant 0 : i32
    %34 = tpu.memref_slice %arg3[%c3_i32_21, %c0_i32_22] : memref<8x128xf32, #tpu.memory_space<vmem>> -> memref<1x128xf32, #tpu.memory_space<vmem>>
    %35 = tpu.memref_slice %arg4[%c3_i32_19] : memref<8x!tpu.dma_semaphore, #tpu.memory_space<semaphore_mem>> -> memref<1x!tpu.dma_semaphore, #tpu.memory_space<semaphore_mem>>
    %36 = tpu.memref_squeeze %35 : memref<1x!tpu.dma_semaphore, #tpu.memory_space<semaphore_mem>> -> memref<!tpu.dma_semaphore, #tpu.memory_space<semaphore_mem>>
    tpu.enqueue_dma source(%33 : memref<1x128xf32, #tpu.memory_space<any>>) target(%34 : memref<1x128xf32, #tpu.memory_space<vmem>>) target_semaphore(%36 : memref<!tpu.dma_semaphore, #tpu.memory_space<semaphore_mem>>)
    %c4_i32 = arith.constant 4 : i32
    %37 = arith.addi %0, %c4_i32 : i32
    %38 = arith.index_cast %37 : i32 to index
    %39 = memref.load %arg1[%38] : memref<16xi32, #tpu.memory_space<smem>>
    %c0_i32_23 = arith.constant 0 : i32
    %c63_i32_24 = arith.constant 63 : i32
    %40 = arith.maxsi %c0_i32_23, %39 : i32
    %41 = arith.minsi %c63_i32_24, %40 : i32
    %c4_i32_25 = arith.constant 4 : i32
    %c0_i32_26 = arith.constant 0 : i32
    %42 = tpu.memref_slice %arg2[%41, %c0_i32_26] : memref<64x128xf32, #tpu.memory_space<any>> -> memref<1x128xf32, #tpu.memory_space<any>>
    %c4_i32_27 = arith.constant 4 : i32
    %c0_i32_28 = arith.constant 0 : i32
    %43 = tpu.memref_slice %arg3[%c4_i32_27, %c0_i32_28] : memref<8x128xf32, #tpu.memory_space<vmem>> -> memref<1x128xf32, #tpu.memory_space<vmem>>
    %44 = tpu.memref_slice %arg4[%c4_i32_25] : memref<8x!tpu.dma_semaphore, #tpu.memory_space<semaphore_mem>> -> memref<1x!tpu.dma_semaphore, #tpu.memory_space<semaphore_mem>>
    %45 = tpu.memref_squeeze %44 : memref<1x!tpu.dma_semaphore, #tpu.memory_space<semaphore_mem>> -> memref<!tpu.dma_semaphore, #tpu.memory_space<semaphore_mem>>
    tpu.enqueue_dma source(%42 : memref<1x128xf32, #tpu.memory_space<any>>) target(%43 : memref<1x128xf32, #tpu.memory_space<vmem>>) target_semaphore(%45 : memref<!tpu.dma_semaphore, #tpu.memory_space<semaphore_mem>>)
    %c5_i32 = arith.constant 5 : i32
    %46 = arith.addi %0, %c5_i32 : i32
    %47 = arith.index_cast %46 : i32 to index
    %48 = memref.load %arg1[%47] : memref<16xi32, #tpu.memory_space<smem>>
    %c0_i32_29 = arith.constant 0 : i32
    %c63_i32_30 = arith.constant 63 : i32
    %49 = arith.maxsi %c0_i32_29, %48 : i32
    %50 = arith.minsi %c63_i32_30, %49 : i32
    %c5_i32_31 = arith.constant 5 : i32
    %c0_i32_32 = arith.constant 0 : i32
    %51 = tpu.memref_slice %arg2[%50, %c0_i32_32] : memref<64x128xf32, #tpu.memory_space<any>> -> memref<1x128xf32, #tpu.memory_space<any>>
    %c5_i32_33 = arith.constant 5 : i32
    %c0_i32_34 = arith.constant 0 : i32
    %52 = tpu.memref_slice %arg3[%c5_i32_33, %c0_i32_34] : memref<8x128xf32, #tpu.memory_space<vmem>> -> memref<1x128xf32, #tpu.memory_space<vmem>>
    %53 = tpu.memref_slice %arg4[%c5_i32_31] : memref<8x!tpu.dma_semaphore, #tpu.memory_space<semaphore_mem>> -> memref<1x!tpu.dma_semaphore, #tpu.memory_space<semaphore_mem>>
    %54 = tpu.memref_squeeze %53 : memref<1x!tpu.dma_semaphore, #tpu.memory_space<semaphore_mem>> -> memref<!tpu.dma_semaphore, #tpu.memory_space<semaphore_mem>>
    tpu.enqueue_dma source(%51 : memref<1x128xf32, #tpu.memory_space<any>>) target(%52 : memref<1x128xf32, #tpu.memory_space<vmem>>) target_semaphore(%54 : memref<!tpu.dma_semaphore, #tpu.memory_space<semaphore_mem>>)
    %c6_i32 = arith.constant 6 : i32
    %55 = arith.addi %0, %c6_i32 : i32
    %56 = arith.index_cast %55 : i32 to index
    %57 = memref.load %arg1[%56] : memref<16xi32, #tpu.memory_space<smem>>
    %c0_i32_35 = arith.constant 0 : i32
    %c63_i32_36 = arith.constant 63 : i32
    %58 = arith.maxsi %c0_i32_35, %57 : i32
    %59 = arith.minsi %c63_i32_36, %58 : i32
    %c6_i32_37 = arith.constant 6 : i32
    %c0_i32_38 = arith.constant 0 : i32
    %60 = tpu.memref_slice %arg2[%59, %c0_i32_38] : memref<64x128xf32, #tpu.memory_space<any>> -> memref<1x128xf32, #tpu.memory_space<any>>
    %c6_i32_39 = arith.constant 6 : i32
    %c0_i32_40 = arith.constant 0 : i32
    %61 = tpu.memref_slice %arg3[%c6_i32_39, %c0_i32_40] : memref<8x128xf32, #tpu.memory_space<vmem>> -> memref<1x128xf32, #tpu.memory_space<vmem>>
    %62 = tpu.memref_slice %arg4[%c6_i32_37] : memref<8x!tpu.dma_semaphore, #tpu.memory_space<semaphore_mem>> -> memref<1x!tpu.dma_semaphore, #tpu.memory_space<semaphore_mem>>
    %63 = tpu.memref_squeeze %62 : memref<1x!tpu.dma_semaphore, #tpu.memory_space<semaphore_mem>> -> memref<!tpu.dma_semaphore, #tpu.memory_space<semaphore_mem>>
    tpu.enqueue_dma source(%60 : memref<1x128xf32, #tpu.memory_space<any>>) target(%61 : memref<1x128xf32, #tpu.memory_space<vmem>>) target_semaphore(%63 : memref<!tpu.dma_semaphore, #tpu.memory_space<semaphore_mem>>)
    %c7_i32 = arith.constant 7 : i32
    %64 = arith.addi %0, %c7_i32 : i32
    %65 = arith.index_cast %64 : i32 to index
    %66 = memref.load %arg1[%65] : memref<16xi32, #tpu.memory_space<smem>>
    %c0_i32_41 = arith.constant 0 : i32
    %c63_i32_42 = arith.constant 63 : i32
    %67 = arith.maxsi %c0_i32_41, %66 : i32
    %68 = arith.minsi %c63_i32_42, %67 : i32
    %c7_i32_43 = arith.constant 7 : i32
    %c0_i32_44 = arith.constant 0 : i32
    %69 = tpu.memref_slice %arg2[%68, %c0_i32_44] : memref<64x128xf32, #tpu.memory_space<any>> -> memref<1x128xf32, #tpu.memory_space<any>>
    %c7_i32_45 = arith.constant 7 : i32
    %c0_i32_46 = arith.constant 0 : i32
    %70 = tpu.memref_slice %arg3[%c7_i32_45, %c0_i32_46] : memref<8x128xf32, #tpu.memory_space<vmem>> -> memref<1x128xf32, #tpu.memory_space<vmem>>
    %71 = tpu.memref_slice %arg4[%c7_i32_43] : memref<8x!tpu.dma_semaphore, #tpu.memory_space<semaphore_mem>> -> memref<1x!tpu.dma_semaphore, #tpu.memory_space<semaphore_mem>>
    %72 = tpu.memref_squeeze %71 : memref<1x!tpu.dma_semaphore, #tpu.memory_space<semaphore_mem>> -> memref<!tpu.dma_semaphore, #tpu.memory_space<semaphore_mem>>
    tpu.enqueue_dma source(%69 : memref<1x128xf32, #tpu.memory_space<any>>) target(%70 : memref<1x128xf32, #tpu.memory_space<vmem>>) target_semaphore(%72 : memref<!tpu.dma_semaphore, #tpu.memory_space<semaphore_mem>>)
    %c0_i32_47 = arith.constant 0 : i32
    %c0_i32_48 = arith.constant 0 : i32
    %73 = tpu.memref_slice %arg2[%5, %c0_i32_48] : memref<64x128xf32, #tpu.memory_space<any>> -> memref<1x128xf32, #tpu.memory_space<any>>
    %c0_i32_49 = arith.constant 0 : i32
    %c0_i32_50 = arith.constant 0 : i32
    %74 = tpu.memref_slice %arg3[%c0_i32_49, %c0_i32_50] : memref<8x128xf32, #tpu.memory_space<vmem>> -> memref<1x128xf32, #tpu.memory_space<vmem>>
    %75 = tpu.memref_slice %arg4[%c0_i32_47] : memref<8x!tpu.dma_semaphore, #tpu.memory_space<semaphore_mem>> -> memref<1x!tpu.dma_semaphore, #tpu.memory_space<semaphore_mem>>
    %76 = tpu.memref_squeeze %75 : memref<1x!tpu.dma_semaphore, #tpu.memory_space<semaphore_mem>> -> memref<!tpu.dma_semaphore, #tpu.memory_space<semaphore_mem>>
    tpu.wait_dma2 semaphore(%76 : memref<!tpu.dma_semaphore, #tpu.memory_space<semaphore_mem>>) src(%73 : memref<1x128xf32, #tpu.memory_space<any>>) dst(%74 : memref<1x128xf32, #tpu.memory_space<vmem>>)
    %c1_i32_51 = arith.constant 1 : i32
    %c0_i32_52 = arith.constant 0 : i32
    %77 = tpu.memref_slice %arg2[%14, %c0_i32_52] : memref<64x128xf32, #tpu.memory_space<any>> -> memref<1x128xf32, #tpu.memory_space<any>>
    %c1_i32_53 = arith.constant 1 : i32
    %c0_i32_54 = arith.constant 0 : i32
    %78 = tpu.memref_slice %arg3[%c1_i32_53, %c0_i32_54] : memref<8x128xf32, #tpu.memory_space<vmem>> -> memref<1x128xf32, #tpu.memory_space<vmem>>
    %79 = tpu.memref_slice %arg4[%c1_i32_51] : memref<8x!tpu.dma_semaphore, #tpu.memory_space<semaphore_mem>> -> memref<1x!tpu.dma_semaphore, #tpu.memory_space<semaphore_mem>>
    %80 = tpu.memref_squeeze %79 : memref<1x!tpu.dma_semaphore, #tpu.memory_space<semaphore_mem>> -> memref<!tpu.dma_semaphore, #tpu.memory_space<semaphore_mem>>
    tpu.wait_dma2 semaphore(%80 : memref<!tpu.dma_semaphore, #tpu.memory_space<semaphore_mem>>) src(%77 : memref<1x128xf32, #tpu.memory_space<any>>) dst(%78 : memref<1x128xf32, #tpu.memory_space<vmem>>)
    %c2_i32_55 = arith.constant 2 : i32
    %c0_i32_56 = arith.constant 0 : i32
    %81 = tpu.memref_slice %arg2[%23, %c0_i32_56] : memref<64x128xf32, #tpu.memory_space<any>> -> memref<1x128xf32, #tpu.memory_space<any>>
    %c2_i32_57 = arith.constant 2 : i32
    %c0_i32_58 = arith.constant 0 : i32
    %82 = tpu.memref_slice %arg3[%c2_i32_57, %c0_i32_58] : memref<8x128xf32, #tpu.memory_space<vmem>> -> memref<1x128xf32, #tpu.memory_space<vmem>>
    %83 = tpu.memref_slice %arg4[%c2_i32_55] : memref<8x!tpu.dma_semaphore, #tpu.memory_space<semaphore_mem>> -> memref<1x!tpu.dma_semaphore, #tpu.memory_space<semaphore_mem>>
    %84 = tpu.memref_squeeze %83 : memref<1x!tpu.dma_semaphore, #tpu.memory_space<semaphore_mem>> -> memref<!tpu.dma_semaphore, #tpu.memory_space<semaphore_mem>>
    tpu.wait_dma2 semaphore(%84 : memref<!tpu.dma_semaphore, #tpu.memory_space<semaphore_mem>>) src(%81 : memref<1x128xf32, #tpu.memory_space<any>>) dst(%82 : memref<1x128xf32, #tpu.memory_space<vmem>>)
    %c3_i32_59 = arith.constant 3 : i32
    %c0_i32_60 = arith.constant 0 : i32
    %85 = tpu.memref_slice %arg2[%32, %c0_i32_60] : memref<64x128xf32, #tpu.memory_space<any>> -> memref<1x128xf32, #tpu.memory_space<any>>
    %c3_i32_61 = arith.constant 3 : i32
    %c0_i32_62 = arith.constant 0 : i32
    %86 = tpu.memref_slice %arg3[%c3_i32_61, %c0_i32_62] : memref<8x128xf32, #tpu.memory_space<vmem>> -> memref<1x128xf32, #tpu.memory_space<vmem>>
    %87 = tpu.memref_slice %arg4[%c3_i32_59] : memref<8x!tpu.dma_semaphore, #tpu.memory_space<semaphore_mem>> -> memref<1x!tpu.dma_semaphore, #tpu.memory_space<semaphore_mem>>
    %88 = tpu.memref_squeeze %87 : memref<1x!tpu.dma_semaphore, #tpu.memory_space<semaphore_mem>> -> memref<!tpu.dma_semaphore, #tpu.memory_space<semaphore_mem>>
    tpu.wait_dma2 semaphore(%88 : memref<!tpu.dma_semaphore, #tpu.memory_space<semaphore_mem>>) src(%85 : memref<1x128xf32, #tpu.memory_space<any>>) dst(%86 : memref<1x128xf32, #tpu.memory_space<vmem>>)
    %c4_i32_63 = arith.constant 4 : i32
    %c0_i32_64 = arith.constant 0 : i32
    %89 = tpu.memref_slice %arg2[%41, %c0_i32_64] : memref<64x128xf32, #tpu.memory_space<any>> -> memref<1x128xf32, #tpu.memory_space<any>>
    %c4_i32_65 = arith.constant 4 : i32
    %c0_i32_66 = arith.constant 0 : i32
    %90 = tpu.memref_slice %arg3[%c4_i32_65, %c0_i32_66] : memref<8x128xf32, #tpu.memory_space<vmem>> -> memref<1x128xf32, #tpu.memory_space<vmem>>
    %91 = tpu.memref_slice %arg4[%c4_i32_63] : memref<8x!tpu.dma_semaphore, #tpu.memory_space<semaphore_mem>> -> memref<1x!tpu.dma_semaphore, #tpu.memory_space<semaphore_mem>>
    %92 = tpu.memref_squeeze %91 : memref<1x!tpu.dma_semaphore, #tpu.memory_space<semaphore_mem>> -> memref<!tpu.dma_semaphore, #tpu.memory_space<semaphore_mem>>
    tpu.wait_dma2 semaphore(%92 : memref<!tpu.dma_semaphore, #tpu.memory_space<semaphore_mem>>) src(%89 : memref<1x128xf32, #tpu.memory_space<any>>) dst(%90 : memref<1x128xf32, #tpu.memory_space<vmem>>)
    %c5_i32_67 = arith.constant 5 : i32
    %c0_i32_68 = arith.constant 0 : i32
    %93 = tpu.memref_slice %arg2[%50, %c0_i32_68] : memref<64x128xf32, #tpu.memory_space<any>> -> memref<1x128xf32, #tpu.memory_space<any>>
    %c5_i32_69 = arith.constant 5 : i32
    %c0_i32_70 = arith.constant 0 : i32
    %94 = tpu.memref_slice %arg3[%c5_i32_69, %c0_i32_70] : memref<8x128xf32, #tpu.memory_space<vmem>> -> memref<1x128xf32, #tpu.memory_space<vmem>>
    %95 = tpu.memref_slice %arg4[%c5_i32_67] : memref<8x!tpu.dma_semaphore, #tpu.memory_space<semaphore_mem>> -> memref<1x!tpu.dma_semaphore, #tpu.memory_space<semaphore_mem>>
    %96 = tpu.memref_squeeze %95 : memref<1x!tpu.dma_semaphore, #tpu.memory_space<semaphore_mem>> -> memref<!tpu.dma_semaphore, #tpu.memory_space<semaphore_mem>>
    tpu.wait_dma2 semaphore(%96 : memref<!tpu.dma_semaphore, #tpu.memory_space<semaphore_mem>>) src(%93 : memref<1x128xf32, #tpu.memory_space<any>>) dst(%94 : memref<1x128xf32, #tpu.memory_space<vmem>>)
    %c6_i32_71 = arith.constant 6 : i32
    %c0_i32_72 = arith.constant 0 : i32
    %97 = tpu.memref_slice %arg2[%59, %c0_i32_72] : memref<64x128xf32, #tpu.memory_space<any>> -> memref<1x128xf32, #tpu.memory_space<any>>
    %c6_i32_73 = arith.constant 6 : i32
    %c0_i32_74 = arith.constant 0 : i32
    %98 = tpu.memref_slice %arg3[%c6_i32_73, %c0_i32_74] : memref<8x128xf32, #tpu.memory_space<vmem>> -> memref<1x128xf32, #tpu.memory_space<vmem>>
    %99 = tpu.memref_slice %arg4[%c6_i32_71] : memref<8x!tpu.dma_semaphore, #tpu.memory_space<semaphore_mem>> -> memref<1x!tpu.dma_semaphore, #tpu.memory_space<semaphore_mem>>
    %100 = tpu.memref_squeeze %99 : memref<1x!tpu.dma_semaphore, #tpu.memory_space<semaphore_mem>> -> memref<!tpu.dma_semaphore, #tpu.memory_space<semaphore_mem>>
    tpu.wait_dma2 semaphore(%100 : memref<!tpu.dma_semaphore, #tpu.memory_space<semaphore_mem>>) src(%97 : memref<1x128xf32, #tpu.memory_space<any>>) dst(%98 : memref<1x128xf32, #tpu.memory_space<vmem>>)
    %c7_i32_75 = arith.constant 7 : i32
    %c0_i32_76 = arith.constant 0 : i32
    %101 = tpu.memref_slice %arg2[%68, %c0_i32_76] : memref<64x128xf32, #tpu.memory_space<any>> -> memref<1x128xf32, #tpu.memory_space<any>>
    %c7_i32_77 = arith.constant 7 : i32
    %c0_i32_78 = arith.constant 0 : i32
    %102 = tpu.memref_slice %arg3[%c7_i32_77, %c0_i32_78] : memref<8x128xf32, #tpu.memory_space<vmem>> -> memref<1x128xf32, #tpu.memory_space<vmem>>
    %103 = tpu.memref_slice %arg4[%c7_i32_75] : memref<8x!tpu.dma_semaphore, #tpu.memory_space<semaphore_mem>> -> memref<1x!tpu.dma_semaphore, #tpu.memory_space<semaphore_mem>>
    %104 = tpu.memref_squeeze %103 : memref<1x!tpu.dma_semaphore, #tpu.memory_space<semaphore_mem>> -> memref<!tpu.dma_semaphore, #tpu.memory_space<semaphore_mem>>
    tpu.wait_dma2 semaphore(%104 : memref<!tpu.dma_semaphore, #tpu.memory_space<semaphore_mem>>) src(%101 : memref<1x128xf32, #tpu.memory_space<any>>) dst(%102 : memref<1x128xf32, #tpu.memory_space<vmem>>)
    %c0_i32_79 = arith.constant 0 : i32
    %105 = arith.addi %0, %c0_i32_79 : i32
    %106 = arith.index_cast %105 : i32 to index
    %107 = memref.load %arg1[%106] : memref<16xi32, #tpu.memory_space<smem>>
    %c0_i32_80 = arith.constant 0 : i32
    %108 = arith.cmpi slt, %107, %c0_i32_80 : i32
    %c64_i32 = arith.constant 64 : i32
    %109 = arith.cmpi sge, %107, %c64_i32 : i32
    %110 = arith.ori %108, %109 : i1
    %111 = arith.extui %110 : i1 to i32
    %c0_i32_81 = arith.constant 0 : i32
    %112 = arith.cmpi ne, %111, %c0_i32_81 : i32
    scf.if %112 {
      %cst = arith.constant 0.000000e+00 : f32
      %169 = vector.broadcast %cst : f32 to vector<1x128xf32>
      %c0 = arith.constant 0 : index
      %c0_110 = arith.constant 0 : index
      %170 = vector.load %arg3[%c0, %c0_110] : memref<8x128xf32, #tpu.memory_space<vmem>>, vector<1x128xf32>
      tpu.vector_store %arg3[%c0, %c0_110], %169 {strides = array<i32>} : memref<8x128xf32, #tpu.memory_space<vmem>>, vector<1x128xf32>,
    } else {
    }
    %c1_i32_82 = arith.constant 1 : i32
    %113 = arith.addi %0, %c1_i32_82 : i32
    %114 = arith.index_cast %113 : i32 to index
    %115 = memref.load %arg1[%114] : memref<16xi32, #tpu.memory_space<smem>>
    %c0_i32_83 = arith.constant 0 : i32
    %116 = arith.cmpi slt, %115, %c0_i32_83 : i32
    %c64_i32_84 = arith.constant 64 : i32
    %117 = arith.cmpi sge, %115, %c64_i32_84 : i32
    %118 = arith.ori %116, %117 : i1
    %119 = arith.extui %118 : i1 to i32
    %c0_i32_85 = arith.constant 0 : i32
    %120 = arith.cmpi ne, %119, %c0_i32_85 : i32
    scf.if %120 {
      %cst = arith.constant 0.000000e+00 : f32
      %169 = vector.broadcast %cst : f32 to vector<1x128xf32>
      %c1 = arith.constant 1 : index
      %c0 = arith.constant 0 : index
      %170 = vector.load %arg3[%c1, %c0] : memref<8x128xf32, #tpu.memory_space<vmem>>, vector<1x128xf32>
      tpu.vector_store %arg3[%c1, %c0], %169 {strides = array<i32>} : memref<8x128xf32, #tpu.memory_space<vmem>>, vector<1x128xf32>,
    } else {
    }
    %c2_i32_86 = arith.constant 2 : i32
    %121 = arith.addi %0, %c2_i32_86 : i32
    %122 = arith.index_cast %121 : i32 to index
    %123 = memref.load %arg1[%122] : memref<16xi32, #tpu.memory_space<smem>>
    %c0_i32_87 = arith.constant 0 : i32
    %124 = arith.cmpi slt, %123, %c0_i32_87 : i32
    %c64_i32_88 = arith.constant 64 : i32
    %125 = arith.cmpi sge, %123, %c64_i32_88 : i32
    %126 = arith.ori %124, %125 : i1
    %127 = arith.extui %126 : i1 to i32
    %c0_i32_89 = arith.constant 0 : i32
    %128 = arith.cmpi ne, %127, %c0_i32_89 : i32
    scf.if %128 {
      %cst = arith.constant 0.000000e+00 : f32
      %169 = vector.broadcast %cst : f32 to vector<1x128xf32>
      %c2 = arith.constant 2 : index
      %c0 = arith.constant 0 : index
      %170 = vector.load %arg3[%c2, %c0] : memref<8x128xf32, #tpu.memory_space<vmem>>, vector<1x128xf32>
      tpu.vector_store %arg3[%c2, %c0], %169 {strides = array<i32>} : memref<8x128xf32, #tpu.memory_space<vmem>>, vector<1x128xf32>,
    } else {
    }
    %c3_i32_90 = arith.constant 3 : i32
    %129 = arith.addi %0, %c3_i32_90 : i32
    %130 = arith.index_cast %129 : i32 to index
    %131 = memref.load %arg1[%130] : memref<16xi32, #tpu.memory_space<smem>>
    %c0_i32_91 = arith.constant 0 : i32
    %132 = arith.cmpi slt, %131, %c0_i32_91 : i32
    %c64_i32_92 = arith.constant 64 : i32
    %133 = arith.cmpi sge, %131, %c64_i32_92 : i32
    %134 = arith.ori %132, %133 : i1
    %135 = arith.extui %134 : i1 to i32
    %c0_i32_93 = arith.constant 0 : i32
    %136 = arith.cmpi ne, %135, %c0_i32_93 : i32
    scf.if %136 {
      %cst = arith.constant 0.000000e+00 : f32
      %169 = vector.broadcast %cst : f32 to vector<1x128xf32>
      %c3 = arith.constant 3 : index
      %c0 = arith.constant 0 : index
      %170 = vector.load %arg3[%c3, %c0] : memref<8x128xf32, #tpu.memory_space<vmem>>, vector<1x128xf32>
      tpu.vector_store %arg3[%c3, %c0], %169 {strides = array<i32>} : memref<8x128xf32, #tpu.memory_space<vmem>>, vector<1x128xf32>,
    } else {
    }
    %c4_i32_94 = arith.constant 4 : i32
    %137 = arith.addi %0, %c4_i32_94 : i32
    %138 = arith.index_cast %137 : i32 to index
    %139 = memref.load %arg1[%138] : memref<16xi32, #tpu.memory_space<smem>>
    %c0_i32_95 = arith.constant 0 : i32
    %140 = arith.cmpi slt, %139, %c0_i32_95 : i32
    %c64_i32_96 = arith.constant 64 : i32
    %141 = arith.cmpi sge, %139, %c64_i32_96 : i32
    %142 = arith.ori %140, %141 : i1
    %143 = arith.extui %142 : i1 to i32
    %c0_i32_97 = arith.constant 0 : i32
    %144 = arith.cmpi ne, %143, %c0_i32_97 : i32
    scf.if %144 {
      %cst = arith.constant 0.000000e+00 : f32
      %169 = vector.broadcast %cst : f32 to vector<1x128xf32>
      %c4 = arith.constant 4 : index
      %c0 = arith.constant 0 : index
      %170 = vector.load %arg3[%c4, %c0] : memref<8x128xf32, #tpu.memory_space<vmem>>, vector<1x128xf32>
      tpu.vector_store %arg3[%c4, %c0], %169 {strides = array<i32>} : memref<8x128xf32, #tpu.memory_space<vmem>>, vector<1x128xf32>,
    } else {
    }
    %c5_i32_98 = arith.constant 5 : i32
    %145 = arith.addi %0, %c5_i32_98 : i32
    %146 = arith.index_cast %145 : i32 to index
    %147 = memref.load %arg1[%146] : memref<16xi32, #tpu.memory_space<smem>>
    %c0_i32_99 = arith.constant 0 : i32
    %148 = arith.cmpi slt, %147, %c0_i32_99 : i32
    %c64_i32_100 = arith.constant 64 : i32
    %149 = arith.cmpi sge, %147, %c64_i32_100 : i32
    %150 = arith.ori %148, %149 : i1
    %151 = arith.extui %150 : i1 to i32
    %c0_i32_101 = arith.constant 0 : i32
    %152 = arith.cmpi ne, %151, %c0_i32_101 : i32
    scf.if %152 {
      %cst = arith.constant 0.000000e+00 : f32
      %169 = vector.broadcast %cst : f32 to vector<1x128xf32>
      %c5 = arith.constant 5 : index
      %c0 = arith.constant 0 : index
      %170 = vector.load %arg3[%c5, %c0] : memref<8x128xf32, #tpu.memory_space<vmem>>, vector<1x128xf32>
      tpu.vector_store %arg3[%c5, %c0], %169 {strides = array<i32>} : memref<8x128xf32, #tpu.memory_space<vmem>>, vector<1x128xf32>,
    } else {
    }
    %c6_i32_102 = arith.constant 6 : i32
    %153 = arith.addi %0, %c6_i32_102 : i32
    %154 = arith.index_cast %153 : i32 to index
    %155 = memref.load %arg1[%154] : memref<16xi32, #tpu.memory_space<smem>>
    %c0_i32_103 = arith.constant 0 : i32
    %156 = arith.cmpi slt, %155, %c0_i32_103 : i32
    %c64_i32_104 = arith.constant 64 : i32
    %157 = arith.cmpi sge, %155, %c64_i32_104 : i32
    %158 = arith.ori %156, %157 : i1
    %159 = arith.extui %158 : i1 to i32
    %c0_i32_105 = arith.constant 0 : i32
    %160 = arith.cmpi ne, %159, %c0_i32_105 : i32
    scf.if %160 {
      %cst = arith.constant 0.000000e+00 : f32
      %169 = vector.broadcast %cst : f32 to vector<1x128xf32>
      %c6 = arith.constant 6 : index
      %c0 = arith.constant 0 : index
      %170 = vector.load %arg3[%c6, %c0] : memref<8x128xf32, #tpu.memory_space<vmem>>, vector<1x128xf32>
      tpu.vector_store %arg3[%c6, %c0], %169 {strides = array<i32>} : memref<8x128xf32, #tpu.memory_space<vmem>>, vector<1x128xf32>,
    } else {
    }
    %c7_i32_106 = arith.constant 7 : i32
    %161 = arith.addi %0, %c7_i32_106 : i32
    %162 = arith.index_cast %161 : i32 to index
    %163 = memref.load %arg1[%162] : memref<16xi32, #tpu.memory_space<smem>>
    %c0_i32_107 = arith.constant 0 : i32
    %164 = arith.cmpi slt, %163, %c0_i32_107 : i32
    %c64_i32_108 = arith.constant 64 : i32
    %165 = arith.cmpi sge, %163, %c64_i32_108 : i32
    %166 = arith.ori %164, %165 : i1
    %167 = arith.extui %166 : i1 to i32
    %c0_i32_109 = arith.constant 0 : i32
    %168 = arith.cmpi ne, %167, %c0_i32_109 : i32
    scf.if %168 {
      %cst = arith.constant 0.000000e+00 : f32
      %169 = vector.broadcast %cst : f32 to vector<1x128xf32>
      %c7 = arith.constant 7 : index
      %c0 = arith.constant 0 : index
      %170 = vector.load %arg3[%c7, %c0] : memref<8x128xf32, #tpu.memory_space<vmem>>, vector<1x128xf32>
      tpu.vector_store %arg3[%c7, %c0], %169 {strides = array<i32>} : memref<8x128xf32, #tpu.memory_space<vmem>>, vector<1x128xf32>,
    } else {
    }
    return
  }
  func.func @transform_1(%arg0: i32, %arg1: memref<16xi32, #tpu.memory_space<smem>>) -> (i32, i32) {
    %c0_i32 = arith.constant 0 : i32
    %c0_i32_0 = arith.constant 0 : i32
    return %arg0, %c0_i32 : i32, i32
  }
}

</mosaic_0001>

<llo_original>
// kernel: tpu_custom_call.1
$region0: #{tpu_custom_call.1}
  #allocation0 [shape = 'u32[]', space=smem, size = 0x4, offset = 0x4, fixed_abs, tag = 'smem constant byte address 0x4 - core index']
  #allocation1 [shape = 'u32[72,128]{1,0:T(1,128)}', space=vmem, size = 0x9000, scoped, tag = 'internal scratch']
  #allocation2 [shape = 's32[8]{0}', space=sflag, size = 0x20, scoped, tag = 'scratch operand']
  #allocation3 [shape = 's32[1]{0}', space=sflag, size = 0x4, scoped, tag = 'scoped memory for tpu_custom_call.1']
  #allocation4 [shape = 'u8[512]{0}', space=smem, size = 0x200, scoped, tag = 'prefetched SMEM operand 0']
  #allocation7 [shape = 's32[]', space=sflag, size = 0x4, offset = 0, fixed_abs, tag = 'sflag constant byte address 0x0 - dummy sync flag']
  #allocation8 [shape = 's32[]', space=sflag, size = 0x4, offset = 0, fixed_abs, tag = 'sflag constant byte address 0x0 - dummy sync flag']
  #allocation9 [shape = 'u32[]', space=smem, size = 0x4, offset = 0x44, fixed_abs, tag = 'smem constant byte address 0x44 - assertion arg 0']
  #allocation10 [shape = 'u32[]', space=smem, size = 0x4, offset = 0x48, fixed_abs, tag = 'smem constant byte address 0x48 - assertion arg 1']
  #allocation11 [shape = 's32[]', space=sflag, size = 0x4, offset = 0, fixed_abs, tag = 'sflag constant byte address 0x0 - dummy sync flag']
  #allocation12 [shape = 's32[]', space=sflag, size = 0x4, offset = 0, fixed_abs, tag = 'sflag constant byte address 0x0 - dummy sync flag']
  #allocation13 [shape = 's32[]', space=sflag, size = 0x4, offset = 0, fixed_abs, tag = 'sflag constant byte address 0x0 - dummy sync flag']
  #allocation14 [shape = 's32[]', space=sflag, size = 0x4, offset = 0, fixed_abs, tag = 'sflag constant byte address 0x0 - dummy sync flag']
  #allocation15 [shape = 's32[]', space=sflag, size = 0x4, offset = 0, fixed_abs, tag = 'sflag constant byte address 0x0 - dummy sync flag']
  #allocation16 [shape = 's32[]', space=sflag, size = 0x4, offset = 0, fixed_abs, tag = 'sflag constant byte address 0x0 - dummy sync flag']
  #allocation17 [shape = 's32[]', space=sflag, size = 0x4, offset = 0, fixed_abs, tag = 'sflag constant byte address 0x0 - dummy sync flag']
  #allocation18 [shape = 's32[]', space=sflag, size = 0x4, offset = 0, fixed_abs, tag = 'sflag constant byte address 0x0 - dummy sync flag']
  #allocation19 [shape = 's32[]', space=sflag, size = 0x4, offset = 0, fixed_abs, tag = 'sflag constant byte address 0x0 - dummy sync flag']
  #allocation20 [shape = 's32[]', space=sflag, size = 0x4, offset = 0, fixed_abs, tag = 'sflag constant byte address 0x0 - dummy sync flag']
  #allocation21 [shape = 's32[]', space=sflag, size = 0x4, offset = 0, fixed_abs, tag = 'sflag constant byte address 0x0 - dummy sync flag']
  #allocation22 [shape = 's32[]', space=sflag, size = 0x4, offset = 0, fixed_abs, tag = 'sflag constant byte address 0x0 - dummy sync flag']
  #allocation23 [shape = 's32[]', space=sflag, size = 0x4, offset = 0, fixed_abs, tag = 'sflag constant byte address 0x0 - dummy sync flag']
  #allocation24 [shape = 's32[]', space=sflag, size = 0x4, offset = 0, fixed_abs, tag = 'sflag constant byte address 0x0 - dummy sync flag']
  %s0 = inlined_call_operand.hbm [shape: s32[16], index: 0, kind: input, shape index: {}]
  %s1 = inlined_call_operand.hbm [shape: f32[64,128], index: 1, kind: input, shape index: {}]
  %s2 = inlined_call_operand.hbm [shape: f32[16,128], index: 2, kind: output, shape index: {}]
  %s3 = sld [smem:[#allocation0]]
  $region89: #{tpu_custom_call.1} parent=0
    _
  %s5 = ssub.s32 1, %s3
  %s6 = scalar_select 0, %s5, %s3
  %s8 = sshll.u32 %s0, 4
  %s9 = int_to_ptr.hbm [resolvable:$true] %s8
  %11 = dma.hbm_to_smem %s9, 16, [#allocation4], [#allocation3]
  %13 = dma.done [#allocation3], 16
  %14 = sfence
  $region1: #{tpu_custom_call.1} parent=0
    #allocation5 [shape = 'u8[8192]{0}', space=vmem, size = 0x2000, scoped, tag = 'output window, operand 0']
    #allocation6 [shape = 's32[2]{0}', space=sflag, size = 0x8, scoped, tag = 'scoped memory for tpu_custom_call.1']
    %15 = vsyncpa [#allocation6], 0
    %s16 = scalar_lea.sflag [#allocation6], 1
    %17 = vsyncpa %s16, 0
    loop: start=0, step=1, limit=3
    $region2: #{tpu_custom_call.1} parent=1 // loop_pre_header
      _
    $region3: #{tpu_custom_call.1} parent=1 // loop_header
      %s19 = sphi 0, %s23
      %p20 = scmp.ge.s32.totalorder %s19, 3
      %s28 = sphi 0, %s30
      %s31 = sphi 0, %s28
      %s41 = sphi 0, %s31
    $region4: #{tpu_custom_call.1} parent=1 // loop_header_branch
      %22 = sbr.rel (%p20) target = $region8
    $region5: #{tpu_custom_call.1} parent=1 // loop_body
      %s24 = ssub.s32 %s19, 1
      %s25 = sadd.s32 %s19, 1
      %s26 = ssub.s32 %s19, %s25
      %p27 = scmp.eq.s32.totalorder %s26, 0
      %s29 = sadd.s32 %s28, 1
      %s30 = scalar_select %p27, %s28, %s29
      %p32 = pneg %p27
      %p33 = scmp.eq.s32.totalorder %s19, 1
      %p34 = por %p32, %p33
      %p35 = scmp.ne.s32.totalorder %s28, %s31
      %p36 = scmp.eq.s32.totalorder %s19, 0
      %p37 = por %p35, %p36
      %p38 = scmp.ne.s32.totalorder %s28, %s31
      %p39 = scmp.eq.s32.totalorder %s24, 1
      %p40 = por %p38, %p39
      %p42 = scmp.ne.s32.totalorder %s31, %s41
      %p43 = scmp.eq.s32.totalorder %s24, 0
      %p44 = por %p42, %p43
      %p45 = scmp.lt.s32.totalorder %s19, 2
      // Predicated region
      $region9: #{tpu_custom_call.1} parent=5 // pred_check
        %p46 = pneg %p45
      $region10: #{tpu_custom_call.1} parent=5 // pred_check_branch
        %48 = sbr.rel (%p46) target = $region12
      $region11: #{tpu_custom_call.1} parent=5 // pred_region
        %p49 = pneg %p37
        %p50 = pneg %p34
        %s51 = sand.u32 %s28, 1
        %s52 = scalar_lea.sflag [#allocation6], %s51
        %s53 = sand.u32 %s28, 1
        %s54 = smul.addr %s53, 8
        %s55 = scalar_lea.vmem [#allocation5], %s54
        %s56 = smul.u32 %s19, 8
        %s57 = sld [smem:[#allocation4 + %s56]]
        %p58 = scmp.gt.s32.totalorder %s57, 0
        %s59 = scalar_select %p58, %s57, 0
        %p60 = scmp.lt.s32.totalorder %s59, 63
        %s61 = scalar_select %p60, %s59, 63
        %s62 = scalar_lea.hbm %s1, %s61
        // Predicated region
        $region13: #{tpu_custom_call.1} parent=11 // pred_check
          _
        $region14: #{tpu_custom_call.1} parent=11 // pred_check_branch
          %64 = sbr.rel target = $region16
        $region15: #{tpu_custom_call.1} parent=11 // pred_region
          %65 = sst [smem:[#allocation9]] [#allocation8]
          %66 = sst [smem:[#allocation10]] [#allocation7]
        $region16: #{tpu_custom_call.1} parent=11 // pred_fallthru
          _
        %68 = shalt.err (0)
        %s70 = sshll.u32 %s62, 4
        %s71 = int_to_ptr.hbm [resolvable:$true] %s70
        %s72 = sshll.u32 %s55, 4
        %s73 = int_to_ptr.vmem [resolvable:$true] %s72
        %75 = dma.hbm_to_vmem [thread:$0]  %s71, 16, %s73, [#allocation2]
        %s76 = sadd.s32 %s56, 1
        %s77 = sld [smem:[#allocation4 + %s76]]
        %p78 = scmp.gt.s32.totalorder %s77, 0
        %s79 = scalar_select %p78, %s77, 0
        %p80 = scmp.lt.s32.totalorder %s79, 63
        %s81 = scalar_select %p80, %s79, 63
        %s82 = scalar_lea.hbm %s1, %s81
        %s83 = scalar_lea.vmem %s55, 1 [#allocation5]
        %s84 = scalar_lea.sflag [#allocation2], 1
        // Predicated region
        $region17: #{tpu_custom_call.1} parent=11 // pred_check
          _
        $region18: #{tpu_custom_call.1} parent=11 // pred_check_branch
          %86 = sbr.rel target = $region20
        $region19: #{tpu_custom_call.1} parent=11 // pred_region
          %87 = sst [smem:[#allocation9]] [#allocation12]
          %88 = sst [smem:[#allocation10]] [#allocation11]
        $region20: #{tpu_custom_call.1} parent=11 // pred_fallthru
          _
        %90 = shalt.err (0)
        %s92 = sshll.u32 %s82, 4
        %s93 = int_to_ptr.hbm [resolvable:$true] %s92
        %s94 = sshll.u32 %s83, 4
        %s95 = int_to_ptr.vmem [resolvable:$true] %s94
        %97 = dma.hbm_to_vmem [thread:$0]  %s93, 16, %s95, %s84
        %s98 = sadd.s32 %s56, 2
        %s99 = sld [smem:[#allocation4 + %s98]]
        %p100 = scmp.gt.s32.totalorder %s99, 0
        %s101 = scalar_select %p100, %s99, 0
        %p102 = scmp.lt.s32.totalorder %s101, 63
        %s103 = scalar_select %p102, %s101, 63
        %s104 = scalar_lea.hbm %s1, %s103
        %s105 = scalar_lea.vmem %s55, 2 [#allocation5]
        %s106 = scalar_lea.sflag [#allocation2], 2
        // Predicated region
        $region21: #{tpu_custom_call.1} parent=11 // pred_check
          _
        $region22: #{tpu_custom_call.1} parent=11 // pred_check_branch
          %108 = sbr.rel target = $region24
        $region23: #{tpu_custom_call.1} parent=11 // pred_region
          %109 = sst [smem:[#allocation9]] [#allocation14]
          %110 = sst [smem:[#allocation10]] [#allocation13]
        $region24: #{tpu_custom_call.1} parent=11 // pred_fallthru
          _
        %112 = shalt.err (0)
        %s114 = sshll.u32 %s104, 4
        %s115 = int_to_ptr.hbm [resolvable:$true] %s114
        %s116 = sshll.u32 %s105, 4
        %s117 = int_to_ptr.vmem [resolvable:$true] %s116
        %119 = dma.hbm_to_vmem [thread:$0]  %s115, 16, %s117, %s106
        %s120 = sadd.s32 %s56, 3
        %s121 = sld [smem:[#allocation4 + %s120]]
        %p122 = scmp.gt.s32.totalorder %s121, 0
        %s123 = scalar_select %p122, %s121, 0
        %p124 = scmp.lt.s32.totalorder %s123, 63
        %s125 = scalar_select %p124, %s123, 63
        %s126 = scalar_lea.hbm %s1, %s125
        %s127 = scalar_lea.vmem %s55, 3 [#allocation5]
        %s128 = scalar_lea.sflag [#allocation2], 3
        // Predicated region
        $region25: #{tpu_custom_call.1} parent=11 // pred_check
          _
        $region26: #{tpu_custom_call.1} parent=11 // pred_check_branch
          %130 = sbr.rel target = $region28
        $region27: #{tpu_custom_call.1} parent=11 // pred_region
          %131 = sst [smem:[#allocation9]] [#allocation16]
          %132 = sst [smem:[#allocation10]] [#allocation15]
        $region28: #{tpu_custom_call.1} parent=11 // pred_fallthru
          _
        %134 = shalt.err (0)
        %s136 = sshll.u32 %s126, 4
        %s137 = int_to_ptr.hbm [resolvable:$true] %s136
        %s138 = sshll.u32 %s127, 4
        %s139 = int_to_ptr.vmem [resolvable:$true] %s138
        %141 = dma.hbm_to_vmem [thread:$0]  %s137, 16, %s139, %s128
        %s142 = sadd.s32 %s56, 4
        %s143 = sld [smem:[#allocation4 + %s142]]
        %p144 = scmp.gt.s32.totalorder %s143, 0
        %s145 = scalar_select %p144, %s143, 0
        %p146 = scmp.lt.s32.totalorder %s145, 63
        %s147 = scalar_select %p146, %s145, 63
        %s148 = scalar_lea.hbm %s1, %s147
        %s149 = scalar_lea.vmem %s55, 4 [#allocation5]
        %s150 = scalar_lea.sflag [#allocation2], 4
        // Predicated region
        $region29: #{tpu_custom_call.1} parent=11 // pred_check
          _
        $region30: #{tpu_custom_call.1} parent=11 // pred_check_branch
          %152 = sbr.rel target = $region32
        $region31: #{tpu_custom_call.1} parent=11 // pred_region
          %153 = sst [smem:[#allocation9]] [#allocation18]
          %154 = sst [smem:[#allocation10]] [#allocation17]
        $region32: #{tpu_custom_call.1} parent=11 // pred_fallthru
          _
        %156 = shalt.err (0)
        %s158 = sshll.u32 %s148, 4
        %s159 = int_to_ptr.hbm [resolvable:$true] %s158
        %s160 = sshll.u32 %s149, 4
        %s161 = int_to_ptr.vmem [resolvable:$true] %s160
        %163 = dma.hbm_to_vmem [thread:$0]  %s159, 16, %s161, %s150
        %s164 = sadd.s32 %s56, 5
        %s165 = sld [smem:[#allocation4 + %s164]]
        %p166 = scmp.gt.s32.totalorder %s165, 0
        %s167 = scalar_select %p166, %s165, 0
        %p168 = scmp.lt.s32.totalorder %s167, 63
        %s169 = scalar_select %p168, %s167, 63
        %s170 = scalar_lea.hbm %s1, %s169
        %s171 = scalar_lea.vmem %s55, 5 [#allocation5]
        %s172 = scalar_lea.sflag [#allocation2], 5
        // Predicated region
        $region33: #{tpu_custom_call.1} parent=11 // pred_check
          _
        $region34: #{tpu_custom_call.1} parent=11 // pred_check_branch
          %174 = sbr.rel target = $region36
        $region35: #{tpu_custom_call.1} parent=11 // pred_region
          %175 = sst [smem:[#allocation9]] [#allocation20]
          %176 = sst [smem:[#allocation10]] [#allocation19]
        $region36: #{tpu_custom_call.1} parent=11 // pred_fallthru
          _
        %178 = shalt.err (0)
        %s180 = sshll.u32 %s170, 4
        %s181 = int_to_ptr.hbm [resolvable:$true] %s180
        %s182 = sshll.u32 %s171, 4
        %s183 = int_to_ptr.vmem [resolvable:$true] %s182
        %185 = dma.hbm_to_vmem [thread:$0]  %s181, 16, %s183, %s172
        %s186 = sadd.s32 %s56, 6
        %s187 = sld [smem:[#allocation4 + %s186]]
        %p188 = scmp.gt.s32.totalorder %s187, 0
        %s189 = scalar_select %p188, %s187, 0
        %p190 = scmp.lt.s32.totalorder %s189, 63
        %s191 = scalar_select %p190, %s189, 63
        %s192 = scalar_lea.hbm %s1, %s191
        %s193 = scalar_lea.vmem %s55, 6 [#allocation5]
        %s194 = scalar_lea.sflag [#allocation2], 6
        // Predicated region
        $region37: #{tpu_custom_call.1} parent=11 // pred_check
          _
        $region38: #{tpu_custom_call.1} parent=11 // pred_check_branch
          %196 = sbr.rel target = $region40
        $region39: #{tpu_custom_call.1} parent=11 // pred_region
          %197 = sst [smem:[#allocation9]] [#allocation22]
          %198 = sst [smem:[#allocation10]] [#allocation21]
        $region40: #{tpu_custom_call.1} parent=11 // pred_fallthru
          _
        %200 = shalt.err (0)
        %s202 = sshll.u32 %s192, 4
        %s203 = int_to_ptr.hbm [resolvable:$true] %s202
        %s204 = sshll.u32 %s193, 4
        %s205 = int_to_ptr.vmem [resolvable:$true] %s204
        %207 = dma.hbm_to_vmem [thread:$0]  %s203, 16, %s205, %s194
        %s208 = sadd.s32 %s56, 7
        %s209 = sld [smem:[#allocation4 + %s208]]
        %p210 = scmp.gt.s32.totalorder %s209, 0
        %s211 = scalar_select %p210, %s209, 0
        %p212 = scmp.lt.s32.totalorder %s211, 63
        %s213 = scalar_select %p212, %s211, 63
        %s214 = scalar_lea.hbm %s1, %s213
        %s215 = scalar_lea.vmem %s55, 7 [#allocation5]
        %s216 = scalar_lea.sflag [#allocation2], 7
        // Predicated region
        $region41: #{tpu_custom_call.1} parent=11 // pred_check
          _
        $region42: #{tpu_custom_call.1} parent=11 // pred_check_branch
          %218 = sbr.rel target = $region44
        $region43: #{tpu_custom_call.1} parent=11 // pred_region
          %219 = sst [smem:[#allocation9]] [#allocation24]
          %220 = sst [smem:[#allocation10]] [#allocation23]
        $region44: #{tpu_custom_call.1} parent=11 // pred_fallthru
          _
        %222 = shalt.err (0)
        %s224 = sshll.u32 %s214, 4
        %s225 = int_to_ptr.hbm [resolvable:$true] %s224
        %s226 = sshll.u32 %s215, 4
        %s227 = int_to_ptr.vmem [resolvable:$true] %s226
        %229 = dma.hbm_to_vmem [thread:$0]  %s225, 16, %s227, %s216
        %s230 = smul.u32 1, 1
        %s231 = sshll.u32 %s230, 4
        %232 = dma.done [#allocation2], %s231
        %s233 = sshll.u32 %s230, 4
        %234 = dma.done %s84, %s233
        %s235 = sshll.u32 %s230, 4
        %236 = dma.done %s106, %s235
        %s237 = sshll.u32 %s230, 4
        %238 = dma.done %s128, %s237
        %s239 = sshll.u32 %s230, 4
        %240 = dma.done %s150, %s239
        %s241 = sshll.u32 %s230, 4
        %242 = dma.done %s172, %s241
        %s243 = sshll.u32 %s230, 4
        %244 = dma.done %s194, %s243
        %s245 = sshll.u32 %s230, 4
        %246 = dma.done %s216, %s245
        %s247 = sld [smem:[#allocation4 + %s56]]
        %p248 = scmp.lt.s32.totalorder %s247, 0
        %p249 = scmp.ge.s32.totalorder %s247, 64
        %p250 = por %p248, %p249
        // Predicated region
        $region45: #{tpu_custom_call.1} parent=11 // pred_check
          %p251 = pneg %p250
        $region46: #{tpu_custom_call.1} parent=11 // pred_check_branch
          %253 = sbr.rel (%p251) target = $region48
        $region47: #{tpu_custom_call.1} parent=11 // pred_region
          %254 = vst [vmem:[%s55] sm:$0x1] 0.0
        $region48: #{tpu_custom_call.1} parent=11 // pred_fallthru
          _
        %s255 = sld [smem:[#allocation4 + %s76]]
        %p256 = scmp.lt.s32.totalorder %s255, 0
        %p257 = scmp.ge.s32.totalorder %s255, 64
        %p258 = por %p256, %p257
        // Predicated region
        $region49: #{tpu_custom_call.1} parent=11 // pred_check
          %p259 = pneg %p258
        $region50: #{tpu_custom_call.1} parent=11 // pred_check_branch
          %261 = sbr.rel (%p259) target = $region52
        $region51: #{tpu_custom_call.1} parent=11 // pred_region
          %262 = vst [vmem:[%s55 + $0x1] sm:$0x1] 0.0
        $region52: #{tpu_custom_call.1} parent=11 // pred_fallthru
          _
        %s263 = sld [smem:[#allocation4 + %s98]]
        %p264 = scmp.lt.s32.totalorder %s263, 0
        %p265 = scmp.ge.s32.totalorder %s263, 64
        %p266 = por %p264, %p265
        // Predicated region
        $region53: #{tpu_custom_call.1} parent=11 // pred_check
          %p267 = pneg %p266
        $region54: #{tpu_custom_call.1} parent=11 // pred_check_branch
          %269 = sbr.rel (%p267) target = $region56
        $region55: #{tpu_custom_call.1} parent=11 // pred_region
          %270 = vst [vmem:[%s55 + $0x2] sm:$0x1] 0.0
        $region56: #{tpu_custom_call.1} parent=11 // pred_fallthru
          _
        %s271 = sld [smem:[#allocation4 + %s120]]
        %p272 = scmp.lt.s32.totalorder %s271, 0
        %p273 = scmp.ge.s32.totalorder %s271, 64
        %p274 = por %p272, %p273
        // Predicated region
        $region57: #{tpu_custom_call.1} parent=11 // pred_check
          %p275 = pneg %p274
        $region58: #{tpu_custom_call.1} parent=11 // pred_check_branch
          %277 = sbr.rel (%p275) target = $region60
        $region59: #{tpu_custom_call.1} parent=11 // pred_region
          %278 = vst [vmem:[%s55 + $0x3] sm:$0x1] 0.0
        $region60: #{tpu_custom_call.1} parent=11 // pred_fallthru
          _
        %s279 = sld [smem:[#allocation4 + %s142]]
        %p280 = scmp.lt.s32.totalorder %s279, 0
        %p281 = scmp.ge.s32.totalorder %s279, 64
        %p282 = por %p280, %p281
        // Predicated region
        $region61: #{tpu_custom_call.1} parent=11 // pred_check
          %p283 = pneg %p282
        $region62: #{tpu_custom_call.1} parent=11 // pred_check_branch
          %285 = sbr.rel (%p283) target = $region64
        $region63: #{tpu_custom_call.1} parent=11 // pred_region
          %286 = vst [vmem:[%s55 + $0x4] sm:$0x1] 0.0
        $region64: #{tpu_custom_call.1} parent=11 // pred_fallthru
          _
        %s287 = sld [smem:[#allocation4 + %s164]]
        %p288 = scmp.lt.s32.totalorder %s287, 0
        %p289 = scmp.ge.s32.totalorder %s287, 64
        %p290 = por %p288, %p289
        // Predicated region
        $region65: #{tpu_custom_call.1} parent=11 // pred_check
          %p291 = pneg %p290
        $region66: #{tpu_custom_call.1} parent=11 // pred_check_branch
          %293 = sbr.rel (%p291) target = $region68
        $region67: #{tpu_custom_call.1} parent=11 // pred_region
          %294 = vst [vmem:[%s55 + $0x5] sm:$0x1] 0.0
        $region68: #{tpu_custom_call.1} parent=11 // pred_fallthru
          _
        %s295 = sld [smem:[#allocation4 + %s186]]
        %p296 = scmp.lt.s32.totalorder %s295, 0
        %p297 = scmp.ge.s32.totalorder %s295, 64
        %p298 = por %p296, %p297
        // Predicated region
        $region69: #{tpu_custom_call.1} parent=11 // pred_check
          %p299 = pneg %p298
        $region70: #{tpu_custom_call.1} parent=11 // pred_check_branch
          %301 = sbr.rel (%p299) target = $region72
        $region71: #{tpu_custom_call.1} parent=11 // pred_region
          %302 = vst [vmem:[%s55 + $0x6] sm:$0x1] 0.0
        $region72: #{tpu_custom_call.1} parent=11 // pred_fallthru
          _
        %s303 = sld [smem:[#allocation4 + %s208]]
        %p304 = scmp.lt.s32.totalorder %s303, 0
        %p305 = scmp.ge.s32.totalorder %s303, 64
        %p306 = por %p304, %p305
        // Predicated region
        $region73: #{tpu_custom_call.1} parent=11 // pred_check
          %p307 = pneg %p306
        $region74: #{tpu_custom_call.1} parent=11 // pred_check_branch
          %309 = sbr.rel (%p307) target = $region76
        $region75: #{tpu_custom_call.1} parent=11 // pred_region
          %310 = vst [vmem:[%s55 + $0x7] sm:$0x1] 0.0
        $region76: #{tpu_custom_call.1} parent=11 // pred_fallthru
          _
        %s311 = sand.u32 %s28, 1
        %s312 = scalar_lea.sflag [#allocation6], %s311
        %s313 = sand.u32 %s28, 1
        %s314 = smul.addr %s313, 8
        %s315 = scalar_lea.vmem [#allocation5], %s314
        // Predicated region
        $region77: #{tpu_custom_call.1} parent=11 // pred_check
          %p316 = pneg %p34
        $region78: #{tpu_custom_call.1} parent=11 // pred_check_branch
          %318 = sbr.rel (%p316) target = $region80
        $region79: #{tpu_custom_call.1} parent=11 // pred_region
          %320 = vsyncadd %s312, 0
          %s321 = smul.addr %s19, 8
          %s322 = scalar_lea.hbm %s2, %s321
          %s324 = sshll.u32 %s315, 4
          %s325 = int_to_ptr.vmem [resolvable:$true] %s324
          %s326 = sshll.u32 %s322, 4
          %s327 = int_to_ptr.hbm [resolvable:$true] %s326
          %329 = dma.vmem_to_hbm [thread:$0]  %s325, 128, %s327, %s312
        $region80: #{tpu_custom_call.1} parent=11 // pred_fallthru
          _
      $region12: #{tpu_custom_call.1} parent=5 // pred_fallthru
        _
      %p330 = scmp.le.s32.totalorder 1, %s19
      // Predicated region
      $region81: #{tpu_custom_call.1} parent=5 // pred_check
        %p331 = pneg %p330
      $region82: #{tpu_custom_call.1} parent=5 // pred_check_branch
        %333 = sbr.rel (%p331) target = $region84
      $region83: #{tpu_custom_call.1} parent=5 // pred_region
        %s334 = ssub.s32 %s19, 1
        // Predicated region
        $region85: #{tpu_custom_call.1} parent=83 // pred_check
          %p335 = pneg %p40
        $region86: #{tpu_custom_call.1} parent=83 // pred_check_branch
          %337 = sbr.rel (%p335) target = $region88
        $region87: #{tpu_custom_call.1} parent=83 // pred_region
          %s338 = sand.u32 %s31, 1
          %s339 = scalar_lea.sflag [#allocation6], %s338
          %s340 = sand.u32 %s31, 1
          %s341 = smul.addr %s340, 8
          %s342 = scalar_lea.vmem [#allocation5], %s341
          %344 = dma.done %s339, 128
        $region88: #{tpu_custom_call.1} parent=83 // pred_fallthru
          _
      $region84: #{tpu_custom_call.1} parent=5 // pred_fallthru
        _
    $region6: #{tpu_custom_call.1} parent=1 // loop_footer
      %s23 = sadd.s32 1, %s19
    $region7: #{tpu_custom_call.1} parent=1 // loop_footer_branch
      %18 = sbr.rel target = $region3
    $region8: #{tpu_custom_call.1} parent=1 // loop_exit
      _
    %345 = vsyncpa [#allocation6], 1
    %s346 = scalar_lea.sflag [#allocation6], 1
    %347 = vsyncpa %s346, 1
  %348 = vsyncmov [#allocation2]
  %s349 = vpop.sfrf %348
  %p350 = scmp.eq.s32.totalorder %s349, 0
  %p351 = pneg %p350
  %353 = shalt.err (%p351)
  %s354 = scalar_lea.sflag [#allocation2], 1
  %355 = vsyncmov %s354
  %s356 = vpop.sfrf %355
  %p357 = scmp.eq.s32.totalorder %s356, 0
  %p358 = pneg %p357
  %360 = shalt.err (%p358)
  %s361 = scalar_lea.sflag [#allocation2], 2
  %362 = vsyncmov %s361
  %s363 = vpop.sfrf %362
  %p364 = scmp.eq.s32.totalorder %s363, 0
  %p365 = pneg %p364
  %367 = shalt.err (%p365)
  %s368 = scalar_lea.sflag [#allocation2], 3
  %369 = vsyncmov %s368
  %s370 = vpop.sfrf %369
  %p371 = scmp.eq.s32.totalorder %s370, 0
  %p372 = pneg %p371
  %374 = shalt.err (%p372)
  %s375 = scalar_lea.sflag [#allocation2], 4
  %376 = vsyncmov %s375
  %s377 = vpop.sfrf %376
  %p378 = scmp.eq.s32.totalorder %s377, 0
  %p379 = pneg %p378
  %381 = shalt.err (%p379)
  %s382 = scalar_lea.sflag [#allocation2], 5
  %383 = vsyncmov %s382
  %s384 = vpop.sfrf %383
  %p385 = scmp.eq.s32.totalorder %s384, 0
  %p386 = pneg %p385
  %388 = shalt.err (%p386)
  %s389 = scalar_lea.sflag [#allocation2], 6
  %390 = vsyncmov %s389
  %s391 = vpop.sfrf %390
  %p392 = scmp.eq.s32.totalorder %s391, 0
  %p393 = pneg %p392
  %395 = shalt.err (%p393)
  %s396 = scalar_lea.sflag [#allocation2], 7
  %397 = vsyncmov %s396
  %s398 = vpop.sfrf %397
  %p399 = scmp.eq.s32.totalorder %s398, 0
  %p400 = pneg %p399
  %402 = shalt.err (%p400)

</llo_original>
